<compile_context>
chip_gen: v7x
topology: tpu7x:2x2x1
jax: 0.10.0
libtpu: 0.0.40
codegen_flags: <defaults>
</compile_context>

<pallas_src>
from functools import partial

import jax
import jax.numpy as jnp
import numpy as np
from jax import lax
from jax.experimental import pallas as pl
from jax.experimental.pallas import tpu as pltpu

KH = KW = 3
STRIDE = 2
PADDING = 1
BN_EPS = 1e-5
ALPHA_LEAKY = 0.03


def _round_up(x, m):
    return ((x + m - 1) // m) * m


# ----------------------------------------------------------------------------
# Pallas kernels
# ----------------------------------------------------------------------------
def _pass1_conv_stats_kernel(p_ref, w_ref, b_ref, m_ref, y_ref, s_ref, ss_ref):
    """One (phase, row-tile) grid cell.

    p_ref : (Kpad, TILE_R)      bf16 patches (K = tap-major, cin-minor)
    w_ref : (Cout_pad, Kpad)    bf16 per-phase weight matrix
    b_ref : (Cout_pad, 1)       f32 conv-transpose bias
    m_ref : (1, TILE_R)         f32 validity mask for the BN statistics
    y_ref : (Cout_pad, TILE_R)  f32 conv+bias output (lane-dense store)
    s_ref, ss_ref : (Cout_pad, 1) f32 per-tile partial sum / sum-of-squares
    """
    # Single fused MXU matmul over the whole (taps x Cin) contraction.
    y = jnp.dot(w_ref[...], p_ref[...], preferred_element_type=jnp.float32)
    y = y + b_ref[...]
    y_ref[...] = y

    # Per-channel partial statistics (lane reduction -> XLU, cheap).
    ym = y * m_ref[...]
    s_ref[...] = jnp.sum(ym, axis=-1, keepdims=True)
    ss_ref[...] = jnp.sum(ym * y, axis=-1, keepdims=True)


def _pass2_bn_act_kernel(y_ref, sc_ref, sh_ref, o_ref):
    """Fused BatchNorm affine + LeakyReLU over one lane-dense tile."""
    y = y_ref[...] * sc_ref[...] + sh_ref[...]
    o_ref[...] = jnp.where(y >= 0.0, y, ALPHA_LEAKY * y)


# ----------------------------------------------------------------------------
# Wrapper glue
# ----------------------------------------------------------------------------
def _phase_patches_and_weights(x_c, w_flip, kpad, cout_pad, compute_dtype):
    """Build per-phase patch slabs (K, R) and weight matrices (Cout_pad, Kpad).

    x_c    : (N, Cin, H+1, W+1) input padded by one zero row/col at bottom/right
    w_flip : (3, 3, Cin, Cout)  spatially flipped ConvTranspose2d weights (f32)
    """
    n, cin = x_c.shape[0], x_c.shape[1]
    h, w = x_c.shape[2] - 1, x_c.shape[3] - 1
    cout = w_flip.shape[-1]
    r = n * h * w

    patches, wmats = [], []
    for ph in (0, 1):
        for pw in (0, 1):
            taps_h = (1,) if ph == 0 else (0, 2)
            taps_w = (1,) if pw == 0 else (0, 2)
            slabs, wtaps = [], []
            for kh in taps_h:
                rh = (ph + kh - 1) // 2
                for kw in taps_w:
                    rw = (pw + kw - 1) // 2
                    slabs.append(x_c[:, :, rh:rh + h, rw:rw + w])  # (N,Cin,H,W)
                    wtaps.append(w_flip[kh, kw])                   # (Cin,Cout)
            ntaps = len(slabs)
            # (t, N, Cin, H, W) -> (t, Cin, N, H, W) -> (t*Cin, R)
            p = jnp.stack(slabs, axis=0).transpose(0, 2, 1, 3, 4)
            p = p.reshape(ntaps * cin, r)
            p = jnp.pad(p, ((0, kpad - ntaps * cin), (0, 0)))
            patches.append(p)

            wm = jnp.stack(wtaps, axis=0).reshape(ntaps * cin, cout)
            wm = jnp.pad(wm, ((0, kpad - ntaps * cin), (0, cout_pad - cout)))
            wmats.append(wm.T)                                     # (Cout_pad, Kpad)

    return (jnp.stack(patches, 0).astype(compute_dtype),
            jnp.stack(wmats, 0).astype(compute_dtype))


def _phase_masks(n, h, w, hout, wout, r_pad):
    """Per-phase (1, R_pad) masks: 1.0 where the output pixel is inside
    (Hout, Wout) (handles output_padding=0 rows/cols and the R padding)."""
    r = n * h * w
    masks = []
    for ph in (0, 1):
        for pw in (0, 1):
            vh = (2 * jnp.arange(h) + ph) < hout
            vw = (2 * jnp.arange(w) + pw) < wout
            m = (vh[:, None] & vw[None, :]).astype(jnp.float32)    # (H, W)
            m = jnp.broadcast_to(m[None], (n, h, w)).reshape(1, r)
            masks.append(jnp.pad(m, ((0, 0), (0, r_pad - r))))
    return jnp.stack(masks, 0)                                     # (4, 1, R_pad)


@partial(jax.jit, static_argnames=("output_size", "compute_dtype", "tile_r"))
def conv_t_block_forward(x_nchw, weight, bias, gamma, beta, *, output_size,
                         compute_dtype=jnp.bfloat16, tile_r=512):
    """Forward pass of conv_t_block.

    x_nchw : (N, Cin, H, W)       PyTorch layout
    weight : (Cin, Cout, KH, KW)  PyTorch ConvTranspose2d weight layout
    bias, gamma, beta : (Cout,)
    output_size : (Hout, Wout) as passed to conv_t(x, output_size=...)
    returns (N, Cout, Hout, Wout) float32
    """
    n, cin, h, w = x_nchw.shape
    cout = weight.shape[1]
    hout, wout = output_size
    op_h = hout - ((h - 1) * STRIDE - 2 * PADDING + KH)
    op_w = wout - ((w - 1) * STRIDE - 2 * PADDING + KW)
    assert 0 <= op_h < STRIDE and 0 <= op_w < STRIDE, "invalid output_size"

    r = n * h * w
    tile = min(tile_r, _round_up(r, 128))
    r_pad = _round_up(r, tile)
    rt = r_pad // tile
    kpad = _round_up(4 * cin, 8)          # 4 taps per phase (zero-padded)
    cp = _round_up(cout, 8)

    # ---- glue: sub-pixel (phase) decomposition inputs -----------------------
    # (weight/bias preparation is static per layer; in a real model hoist it.)
    x_c = jnp.pad(x_nchw.astype(compute_dtype),
                  ((0, 0), (0, 0), (0, 1), (0, 1)))
    w_flip = jnp.transpose(weight[:, :, ::-1, ::-1],
                           (2, 3, 0, 1)).astype(jnp.float32)       # (3,3,Cin,Cout)
    patches, wmats = _phase_patches_and_weights(x_c, w_flip, kpad, cp,
                                                compute_dtype)
    patches = jnp.pad(patches, ((0, 0), (0, 0), (0, r_pad - r)))   # (4,Kpad,Rp)
    masks = _phase_masks(n, h, w, hout, wout, r_pad)               # (4,1,Rp)
    bias2 = jnp.pad(bias.astype(jnp.float32), (0, cp - cout)).reshape(cp, 1)

    cparams = pltpu.CompilerParams(
        dimension_semantics=("parallel", "parallel"),
        vmem_limit_bytes=32 * 1024 * 1024)

    flops = 2 * 4 * kpad * cp * r_pad
    bytes_acc = (4 * kpad * r_pad * patches.dtype.itemsize
                 + 4 * cp * kpad * wmats.dtype.itemsize
                 + 4 * cp * r_pad * 4 + 2 * 4 * rt * cp * 4)

    # ---- pass 1: conv(+bias) tiles and per-tile BN partial statistics -------
    y_conv, psum, psumsq = pl.pallas_call(
        _pass1_conv_stats_kernel,
        out_shape=(jax.ShapeDtypeStruct((4, cp, r_pad), jnp.float32),
                   jax.ShapeDtypeStruct((4, rt, cp, 1), jnp.float32),
                   jax.ShapeDtypeStruct((4, rt, cp, 1), jnp.float32)),
        grid=(4, rt),
        in_specs=[
            pl.BlockSpec((None, kpad, tile), lambda p, t: (p, 0, t)),
            pl.BlockSpec((None, cp, kpad), lambda p, t: (p, 0, 0)),
            pl.BlockSpec((cp, 1), lambda p, t: (0, 0)),
            pl.BlockSpec((None, 1, tile), lambda p, t: (p, 0, t)),
        ],
        out_specs=(
            pl.BlockSpec((None, cp, tile), lambda p, t: (p, 0, t)),
            pl.BlockSpec((None, None, cp, 1), lambda p, t: (p, t, 0, 0)),
            pl.BlockSpec((None, None, cp, 1), lambda p, t: (p, t, 0, 0)),
        ),
        compiler_params=cparams,
        cost_estimate=pl.CostEstimate(flops=flops, transcendentals=0,
                                      bytes_accessed=bytes_acc),
    )(patches, wmats, bias2, masks)

    # ---- tiny finalize of the batch statistics (f32, in the wrapper) --------
    count = float(n * hout * wout)
    mean = jnp.sum(psum, axis=(0, 1)) / count                      # (cp,1)
    var = jnp.maximum(jnp.sum(psumsq, axis=(0, 1)) / count - mean * mean, 0.0)
    gamma2 = jnp.pad(gamma.astype(jnp.float32), (0, cp - cout)).reshape(cp, 1)
    beta2 = jnp.pad(beta.astype(jnp.float32), (0, cp - cout)).reshape(cp, 1)
    scale = gamma2 * lax.rsqrt(var + BN_EPS)
    shift = beta2 - mean * scale

    # ---- pass 2: fused BN affine + LeakyReLU ---------------------------------
    y_act = pl.pallas_call(
        _pass2_bn_act_kernel,
        out_shape=jax.ShapeDtypeStruct((4, cp, r_pad), jnp.float32),
        grid=(4, rt),
        in_specs=[
            pl.BlockSpec((None, cp, tile), lambda p, t: (p, 0, t)),
            pl.BlockSpec((cp, 1), lambda p, t: (0, 0)),
            pl.BlockSpec((cp, 1), lambda p, t: (0, 0)),
        ],
        out_specs=pl.BlockSpec((None, cp, tile), lambda p, t: (p, 0, t)),
        compiler_params=cparams,
    )(y_conv, scale, shift)

    # ---- glue: interleave the 4 phases into NCHW and crop to output_size ----
    y = y_act[:, :cout, :r].reshape(2, 2, cout, n, h, w)           # (ph,pw,C,N,H,W)
    out = jnp.transpose(y, (3, 2, 4, 0, 5, 1)).reshape(n, cout, 2 * h, 2 * w)
    return out[:, :, :hout, :wout]


# ----------------------------------------------------------------------------
# Pure-JAX reference (lax.conv_general_dilated) for verification
# ----------------------------------------------------------------------------
def _reference(x_nchw, weight, bias, gamma, beta, output_size):
    n, cin, h, w = x_nchw.shape
    hout, wout = output_size
    op_h = hout - ((h - 1) * STRIDE - 2 * PADDING + KH)
    op_w = wout - ((w - 1) * STRIDE - 2 * PADDING + KW)
    lo = KH - 1 - PADDING
    x_nhwc = jnp.transpose(x_nchw, (0, 2, 3, 1)).astype(jnp.float32)
    w_hwio = jnp.transpose(weight[:, :, ::-1, ::-1], (2, 3, 0, 1)).astype(jnp.float32)
    y = lax.conv_general_dilated(
        x_nhwc, w_hwio,
        window_strides=(1, 1),
        padding=((lo, lo + op_h), (lo, lo + op_w)),
        lhs_dilation=(STRIDE, STRIDE),
        dimension_numbers=("NHWC", "HWIO", "NHWC"),
        precision=lax.Precision.HIGHEST) + bias
    mean = jnp.mean(y, axis=(0, 1, 2), keepdims=True)
    var = jnp.mean((y - mean) ** 2, axis=(0, 1, 2), keepdims=True)
    y = (y - mean) * lax.rsqrt(var + BN_EPS) * gamma + beta
    y = jnp.where(y >= 0, y, ALPHA_LEAKY * y)
    return jnp.transpose(y, (0, 3, 1, 2))


if __name__ == "__main__":
    key = jax.random.PRNGKey(0)
    k1, k2, k3, k4, k5 = jax.random.split(key, 5)

    N, CIN, COUT, H, W = 2, 4, 8, 16, 16
    x = jax.random.normal(k1, (N, CIN, H, W), jnp.float32)
    weight = 0.1 * jax.random.normal(k2, (CIN, COUT, KH, KW), jnp.float32)
    bias = 0.1 * jax.random.normal(k3, (COUT,), jnp.float32)
    gamma = 1.0 + 0.1 * jax.random.normal(k4, (COUT,), jnp.float32)
    beta = 0.1 * jax.random.normal(k5, (COUT,), jnp.float32)

    # The kernel feeds the MXU bf16 inputs (f32 accumulate); round the reference
    # inputs to bf16 as well so the comparison isolates kernel correctness.
    x_q = x.astype(jnp.bfloat16).astype(jnp.float32)
    w_q = weight.astype(jnp.bfloat16).astype(jnp.float32)

    # typical use (output_size = 2*spatial) plus an odd output_size (op=0 on H)
    for output_size in ((2 * H, 2 * W), (2 * H - 1, 2 * W)):
        out = jax.block_until_ready(
            conv_t_block_forward(x, weight, bias, gamma, beta,
                                 output_size=output_size))
        ref = jax.block_until_ready(
            _reference(x_q, w_q, bias, gamma, beta, output_size))
        np.testing.assert_allclose(np.asarray(out), np.asarray(ref),
                                   rtol=1e-3, atol=1e-3)

    print("KERNEL_OK")
</pallas_src>

<mosaic_0001>
module attributes {stable_mosaic.version = 11 : i64} {
  func.func @_pass1_conv_stats_kernel(%arg0: i32, %arg1: i32, %arg2: memref<1x16x512xbf16, #tpu.memory_space<vmem>>, %arg3: memref<1x8x16xbf16, #tpu.memory_space<vmem>>, %arg4: memref<8x1xf32, #tpu.memory_space<vmem>>, %arg5: memref<1x1x512xf32, #tpu.memory_space<vmem>>, %arg6: memref<1x8x512xf32, #tpu.memory_space<vmem>>, %arg7: memref<1x1x8x1xf32, #tpu.memory_space<vmem>>, %arg8: memref<1x1x8x1xf32, #tpu.memory_space<vmem>>) attributes {dimension_semantics = [#tpu.dimension_semantics<parallel>, #tpu.dimension_semantics<parallel>], iteration_bounds = array<i64: 4, 1>, scalar_prefetch = 0 : i64, scratch_operands = 0 : i64, tpu.core_type = #tpu.core_type<tc>, window_params = [{transform_indices = @transform_0, window_bounds = array<i64: 1, 16, 512>}, {transform_indices = @transform_1, window_bounds = array<i64: 1, 8, 16>}, {pipeline_mode = #tpu.pipeline_mode<synchronous>, transform_indices = @transform_2, window_bounds = array<i64: 8, 1>}, {transform_indices = @transform_3, window_bounds = array<i64: 1, 1, 512>}, {transform_indices = @transform_4, window_bounds = array<i64: 1, 8, 512>}, {transform_indices = @transform_5, window_bounds = array<i64: 1, 1, 8, 1>}, {transform_indices = @transform_6, window_bounds = array<i64: 1, 1, 8, 1>}]} {
    %c0 = arith.constant 0 : index
    %c0_0 = arith.constant 0 : index
    %c0_1 = arith.constant 0 : index
    %0 = vector.load %arg3[%c0, %c0_0, %c0_1] : memref<1x8x16xbf16, #tpu.memory_space<vmem>>, vector<1x8x16xbf16>
    %1 = vector.shape_cast %0 : vector<1x8x16xbf16> to vector<8x16xbf16>
    %c0_2 = arith.constant 0 : index
    %c0_3 = arith.constant 0 : index
    %c0_4 = arith.constant 0 : index
    %2 = vector.load %arg2[%c0_2, %c0_3, %c0_4] : memref<1x16x512xbf16, #tpu.memory_space<vmem>>, vector<1x16x512xbf16>
    %3 = vector.shape_cast %2 : vector<1x16x512xbf16> to vector<16x512xbf16>
    %cst = arith.constant dense<0.000000e+00> : vector<8x512xf32>
    %4 = tpu.matmul %1, %3, %cst {dimension_numbers = #tpu.dot_dimension_numbers<[1], [0], [0], [1], [0, 0, 1, 1], [], []>} : vector<8x16xbf16>, vector<16x512xbf16>, vector<8x512xf32> -> vector<8x512xf32>
    %c0_5 = arith.constant 0 : index
    %c0_6 = arith.constant 0 : index
    %5 = vector.load %arg4[%c0_5, %c0_6] : memref<8x1xf32, #tpu.memory_space<vmem>>, vector<8x1xf32>
    %6 = vector.broadcast %5 : vector<8x1xf32> to vector<8x512xf32>
    %7 = arith.addf %4, %6 : vector<8x512xf32>
    %c0_7 = arith.constant 0 : index
    %c0_8 = arith.constant 0 : index
    %c0_9 = arith.constant 0 : index
    %8 = vector.load %arg6[%c0_7, %c0_8, %c0_9] : memref<1x8x512xf32, #tpu.memory_space<vmem>>, vector<1x8x512xf32>
    %9 = vector.shape_cast %8 : vector<1x8x512xf32> to vector<8x512xf32>
    %10 = vector.shape_cast %7 : vector<8x512xf32> to vector<1x8x512xf32>
    tpu.vector_store %arg6[%c0_7, %c0_8, %c0_9], %10 {strides = array<i32>} : memref<1x8x512xf32, #tpu.memory_space<vmem>>, vector<1x8x512xf32>,
    %c0_10 = arith.constant 0 : index
    %c0_11 = arith.constant 0 : index
    %c0_12 = arith.constant 0 : index
    %11 = vector.load %arg5[%c0_10, %c0_11, %c0_12] : memref<1x1x512xf32, #tpu.memory_space<vmem>>, vector<1x1x512xf32>
    %12 = vector.shape_cast %11 : vector<1x1x512xf32> to vector<1x512xf32>
    %13 = vector.broadcast %12 : vector<1x512xf32> to vector<8x512xf32>
    %14 = arith.mulf %7, %13 : vector<8x512xf32>
    %cst_13 = arith.constant dense<0.000000e+00> : vector<8xf32>
    %15 = vector.multi_reduction <add>, %14, %cst_13 [1] : vector<8x512xf32> to vector<8xf32>
    %16 = vector.shape_cast %15 : vector<8xf32> to vector<8x1xf32>
    %c0_14 = arith.constant 0 : index
    %c0_15 = arith.constant 0 : index
    %c0_16 = arith.constant 0 : index
    %c0_17 = arith.constant 0 : index
    %17 = vector.load %arg7[%c0_14, %c0_15, %c0_16, %c0_17] : memref<1x1x8x1xf32, #tpu.memory_space<vmem>>, vector<1x1x8x1xf32>
    %18 = vector.shape_cast %17 : vector<1x1x8x1xf32> to vector<8x1xf32>
    %19 = vector.shape_cast %16 : vector<8x1xf32> to vector<1x1x8x1xf32>
    tpu.vector_store %arg7[%c0_14, %c0_15, %c0_16, %c0_17], %19 {strides = array<i32>} : memref<1x1x8x1xf32, #tpu.memory_space<vmem>>, vector<1x1x8x1xf32>,
    %20 = arith.mulf %14, %7 : vector<8x512xf32>
    %cst_18 = arith.constant dense<0.000000e+00> : vector<8xf32>
    %21 = vector.multi_reduction <add>, %20, %cst_18 [1] : vector<8x512xf32> to vector<8xf32>
    %22 = vector.shape_cast %21 : vector<8xf32> to vector<8x1xf32>
    %c0_19 = arith.constant 0 : index
    %c0_20 = arith.constant 0 : index
    %c0_21 = arith.constant 0 : index
    %c0_22 = arith.constant 0 : index
    %23 = vector.load %arg8[%c0_19, %c0_20, %c0_21, %c0_22] : memref<1x1x8x1xf32, #tpu.memory_space<vmem>>, vector<1x1x8x1xf32>
    %24 = vector.shape_cast %23 : vector<1x1x8x1xf32> to vector<8x1xf32>
    %25 = vector.shape_cast %22 : vector<8x1xf32> to vector<1x1x8x1xf32>
    tpu.vector_store %arg8[%c0_19, %c0_20, %c0_21, %c0_22], %25 {strides = array<i32>} : memref<1x1x8x1xf32, #tpu.memory_space<vmem>>, vector<1x1x8x1xf32>,
    return
  }
  func.func @transform_0(%arg0: i32, %arg1: i32) -> (i32, i32, i32) {
    %c0_i32 = arith.constant 0 : i32
    %c0_i32_0 = arith.constant 0 : i32
    return %arg0, %c0_i32, %arg1 : i32, i32, i32
  }
  func.func @transform_1(%arg0: i32, %arg1: i32) -> (i32, i32, i32) {
    %c0_i32 = arith.constant 0 : i32
    %c0_i32_0 = arith.constant 0 : i32
    %c0_i32_1 = arith.constant 0 : i32
    return %arg0, %c0_i32, %c0_i32_0 : i32, i32, i32
  }
  func.func @transform_2(%arg0: i32, %arg1: i32) -> (i32, i32) {
    %c0_i32 = arith.constant 0 : i32
    %c0_i32_0 = arith.constant 0 : i32
    %c0_i32_1 = arith.constant 0 : i32
    return %c0_i32, %c0_i32_0 : i32, i32
  }
  func.func @transform_3(%arg0: i32, %arg1: i32) -> (i32, i32, i32) {
    %c0_i32 = arith.constant 0 : i32
    %c0_i32_0 = arith.constant 0 : i32
    return %arg0, %c0_i32, %arg1 : i32, i32, i32
  }
  func.func @transform_4(%arg0: i32, %arg1: i32) -> (i32, i32, i32) {
    %c0_i32 = arith.constant 0 : i32
    %c0_i32_0 = arith.constant 0 : i32
    return %arg0, %c0_i32, %arg1 : i32, i32, i32
  }
  func.func @transform_5(%arg0: i32, %arg1: i32) -> (i32, i32, i32, i32) {
    %c0_i32 = arith.constant 0 : i32
    %c0_i32_0 = arith.constant 0 : i32
    %c0_i32_1 = arith.constant 0 : i32
    return %arg0, %arg1, %c0_i32, %c0_i32_0 : i32, i32, i32, i32
  }
  func.func @transform_6(%arg0: i32, %arg1: i32) -> (i32, i32, i32, i32) {
    %c0_i32 = arith.constant 0 : i32
    %c0_i32_0 = arith.constant 0 : i32
    %c0_i32_1 = arith.constant 0 : i32
    return %arg0, %arg1, %c0_i32, %c0_i32_0 : i32, i32, i32, i32
  }
}

module attributes {stable_mosaic.version = 11 : i64} {
  func.func @_pass2_bn_act_kernel(%arg0: i32, %arg1: i32, %arg2: memref<1x8x512xf32, #tpu.memory_space<vmem>>, %arg3: memref<8x1xf32, #tpu.memory_space<vmem>>, %arg4: memref<8x1xf32, #tpu.memory_space<vmem>>, %arg5: memref<1x8x512xf32, #tpu.memory_space<vmem>>) attributes {dimension_semantics = [#tpu.dimension_semantics<parallel>, #tpu.dimension_semantics<parallel>], iteration_bounds = array<i64: 4, 1>, scalar_prefetch = 0 : i64, scratch_operands = 0 : i64, tpu.core_type = #tpu.core_type<tc>, window_params = [{transform_indices = @transform_0, window_bounds = array<i64: 1, 8, 512>}, {pipeline_mode = #tpu.pipeline_mode<synchronous>, transform_indices = @transform_1, window_bounds = array<i64: 8, 1>}, {pipeline_mode = #tpu.pipeline_mode<synchronous>, transform_indices = @transform_2, window_bounds = array<i64: 8, 1>}, {transform_indices = @transform_3, window_bounds = array<i64: 1, 8, 512>}]} {
    %c0 = arith.constant 0 : index
    %c0_0 = arith.constant 0 : index
    %c0_1 = arith.constant 0 : index
    %0 = vector.load %arg2[%c0, %c0_0, %c0_1] : memref<1x8x512xf32, #tpu.memory_space<vmem>>, vector<1x8x512xf32>
    %1 = vector.shape_cast %0 : vector<1x8x512xf32> to vector<8x512xf32>
    %c0_2 = arith.constant 0 : index
    %c0_3 = arith.constant 0 : index
    %2 = vector.load %arg3[%c0_2, %c0_3] : memref<8x1xf32, #tpu.memory_space<vmem>>, vector<8x1xf32>
    %3 = vector.broadcast %2 : vector<8x1xf32> to vector<8x512xf32>
    %4 = arith.mulf %1, %3 : vector<8x512xf32>
    %c0_4 = arith.constant 0 : index
    %c0_5 = arith.constant 0 : index
    %5 = vector.load %arg4[%c0_4, %c0_5] : memref<8x1xf32, #tpu.memory_space<vmem>>, vector<8x1xf32>
    %6 = vector.broadcast %5 : vector<8x1xf32> to vector<8x512xf32>
    %7 = arith.addf %4, %6 : vector<8x512xf32>
    %cst = arith.constant 0.000000e+00 : f32
    %8 = vector.broadcast %cst : f32 to vector<8x512xf32>
    %9 = arith.cmpf oge, %7, %8 : vector<8x512xf32>
    %cst_6 = arith.constant 3.000000e-02 : f32
    %10 = vector.broadcast %cst_6 : f32 to vector<8x512xf32>
    %11 = arith.mulf %10, %7 : vector<8x512xf32>
    %12 = arith.select %9, %7, %11 : vector<8x512xi1>, vector<8x512xf32>
    %c0_7 = arith.constant 0 : index
    %c0_8 = arith.constant 0 : index
    %c0_9 = arith.constant 0 : index
    %13 = vector.load %arg5[%c0_7, %c0_8, %c0_9] : memref<1x8x512xf32, #tpu.memory_space<vmem>>, vector<1x8x512xf32>
    %14 = vector.shape_cast %13 : vector<1x8x512xf32> to vector<8x512xf32>
    %15 = vector.shape_cast %12 : vector<8x512xf32> to vector<1x8x512xf32>
    tpu.vector_store %arg5[%c0_7, %c0_8, %c0_9], %15 {strides = array<i32>} : memref<1x8x512xf32, #tpu.memory_space<vmem>>, vector<1x8x512xf32>,
    return
  }
  func.func @transform_0(%arg0: i32, %arg1: i32) -> (i32, i32, i32) {
    %c0_i32 = arith.constant 0 : i32
    %c0_i32_0 = arith.constant 0 : i32
    return %arg0, %c0_i32, %arg1 : i32, i32, i32
  }
  func.func @transform_1(%arg0: i32, %arg1: i32) -> (i32, i32) {
    %c0_i32 = arith.constant 0 : i32
    %c0_i32_0 = arith.constant 0 : i32
    %c0_i32_1 = arith.constant 0 : i32
    return %c0_i32, %c0_i32_0 : i32, i32
  }
  func.func @transform_2(%arg0: i32, %arg1: i32) -> (i32, i32) {
    %c0_i32 = arith.constant 0 : i32
    %c0_i32_0 = arith.constant 0 : i32
    %c0_i32_1 = arith.constant 0 : i32
    return %c0_i32, %c0_i32_0 : i32, i32
  }
  func.func @transform_3(%arg0: i32, %arg1: i32) -> (i32, i32, i32) {
    %c0_i32 = arith.constant 0 : i32
    %c0_i32_0 = arith.constant 0 : i32
    return %arg0, %c0_i32, %arg1 : i32, i32, i32
  }
}

</mosaic_0001>

<llo_original>
// kernel: conv_t_block_forward.3
$region0: #{conv_t_block_forward.3}
  #allocation0 [shape = 'u32[]', space=smem, size = 0x4, offset = 0x4, fixed_abs, tag = 'smem constant byte address 0x4 - core index']
  #allocation1 [shape = 'u32[144,128]{1,0:T(1,128)}', space=vmem, size = 0x12000, scoped, tag = 'internal scratch']
  %s0 = inlined_call_operand.vmem [shape: f32[4,8,512], index: 0, kind: input, shape index: {}]
  %s1 = inlined_call_operand.vmem [shape: f32[8,1], index: 1, kind: input, shape index: {}]
  %s2 = inlined_call_operand.vmem [shape: f32[8,1], index: 2, kind: input, shape index: {}]
  %s3 = inlined_call_operand.vmem [shape: f32[4,8,512], index: 3, kind: output, shape index: {}]
  %s4 = sld [smem:[#allocation0]]
  $region45: #{conv_t_block_forward.3} parent=0
    _
  %s6 = ssub.s32 1, %s4
  %s7 = scalar_select 0, %s6, %s4
  loop: start=0, step=1, limit=6
  $region2: #{conv_t_block_forward.3} parent=0 // loop_pre_header
    _
  $region3: #{conv_t_block_forward.3} parent=0 // loop_header
    %s9 = sphi 0, %s13
    %p10 = scmp.ge.s32.totalorder %s9, 6
    %s16 = sphi 0, %s28
    %s17 = sphi 0, %s24
    %s18 = sphi 0, %s16
    %s19 = sphi 0, %s17
    %s20 = sphi 0, %s18
    %s21 = sphi 0, %s19
    %s33 = sphi 0, %s35
    %s36 = sphi 0, %s33
    %s37 = sphi 0, %s36
    %s53 = sphi 0, %s37
    %s57 = sphi 0, %s57
    %s59 = sphi 0, %s57
    %s60 = sphi 0, %s59
    %s74 = sphi 0, %s60
    %s78 = sphi 0, %s78
    %s80 = sphi 0, %s78
    %s81 = sphi 0, %s80
    %s95 = sphi 0, %s81
    %s103 = sphi 0, %s105
    %s106 = sphi 0, %s103
    %s107 = sphi 0, %s106
    %s123 = sphi 0, %s107
  $region4: #{conv_t_block_forward.3} parent=0 // loop_header_branch
    %12 = sbr.rel (%p10) target = $region8
  $region5: #{conv_t_block_forward.3} parent=0 // loop_body
    %s14 = ssub.s32 %s9, 1
    %s15 = ssub.s32 %s9, 2
    %s22 = sadd.s32 1, %s17
    %p23 = scmp.ge.s32.totalorder %s22, 1
    %s24 = scalar_select %p23, 0, %s22
    %s25 = sadd.s32 1, %s16
    %s26 = scalar_select %p23, %s25, %s16
    %p27 = scmp.ge.s32.totalorder %s26, 4
    %s28 = scalar_select %p27, 0, %s26
    %s29 = ssub.s32 %s16, %s28
    %s30 = ssub.s32 %s17, %s24
    %s31 = sor.u32 %s29, %s30
    %p32 = scmp.eq.s32.totalorder %s31, 0
    %s34 = sadd.s32 %s33, 1
    %s35 = scalar_select %p32, %s33, %s34
    %p38 = pneg %p32
    %p39 = scmp.eq.s32.totalorder %s9, 3
    %p40 = por %p38, %p39
    %p41 = scmp.ne.s32.totalorder %s33, %s36
    %p42 = scmp.eq.s32.totalorder %s9, 0
    %p43 = por %p41, %p42
    %p44 = scmp.ne.s32.totalorder %s33, %s36
    %p45 = scmp.eq.s32.totalorder %s14, 3
    %p46 = por %p44, %p45
    %p47 = scmp.ne.s32.totalorder %s36, %s37
    %p48 = scmp.eq.s32.totalorder %s14, 0
    %p49 = por %p47, %p48
    %p50 = scmp.ne.s32.totalorder %s36, %s37
    %p51 = scmp.eq.s32.totalorder %s15, 3
    %p52 = por %p50, %p51
    %p54 = scmp.ne.s32.totalorder %s37, %s53
    %p55 = scmp.eq.s32.totalorder %s15, 0
    %p56 = por %p54, %p55
    %s58 = sadd.s32 %s57, 1
    %p61 = scmp.eq.s32.totalorder %s9, 3
    %p62 = scmp.ne.s32.totalorder %s57, %s59
    %p63 = scmp.eq.s32.totalorder %s9, 0
    %p64 = por %p62, %p63
    %p65 = scmp.ne.s32.totalorder %s57, %s59
    %p66 = scmp.eq.s32.totalorder %s14, 3
    %p67 = por %p65, %p66
    %p68 = scmp.ne.s32.totalorder %s59, %s60
    %p69 = scmp.eq.s32.totalorder %s14, 0
    %p70 = por %p68, %p69
    %p71 = scmp.ne.s32.totalorder %s59, %s60
    %p72 = scmp.eq.s32.totalorder %s15, 3
    %p73 = por %p71, %p72
    %p75 = scmp.ne.s32.totalorder %s60, %s74
    %p76 = scmp.eq.s32.totalorder %s15, 0
    %p77 = por %p75, %p76
    %s79 = sadd.s32 %s78, 1
    %p82 = scmp.eq.s32.totalorder %s9, 3
    %p83 = scmp.ne.s32.totalorder %s78, %s80
    %p84 = scmp.eq.s32.totalorder %s9, 0
    %p85 = por %p83, %p84
    %p86 = scmp.ne.s32.totalorder %s78, %s80
    %p87 = scmp.eq.s32.totalorder %s14, 3
    %p88 = por %p86, %p87
    %p89 = scmp.ne.s32.totalorder %s80, %s81
    %p90 = scmp.eq.s32.totalorder %s14, 0
    %p91 = por %p89, %p90
    %p92 = scmp.ne.s32.totalorder %s80, %s81
    %p93 = scmp.eq.s32.totalorder %s15, 3
    %p94 = por %p92, %p93
    %p96 = scmp.ne.s32.totalorder %s81, %s95
    %p97 = scmp.eq.s32.totalorder %s15, 0
    %p98 = por %p96, %p97
    %s99 = ssub.s32 %s16, %s28
    %s100 = ssub.s32 %s17, %s24
    %s101 = sor.u32 %s99, %s100
    %p102 = scmp.eq.s32.totalorder %s101, 0
    %s104 = sadd.s32 %s103, 1
    %s105 = scalar_select %p102, %s103, %s104
    %p108 = pneg %p102
    %p109 = scmp.eq.s32.totalorder %s9, 3
    %p110 = por %p108, %p109
    %p111 = scmp.ne.s32.totalorder %s103, %s106
    %p112 = scmp.eq.s32.totalorder %s9, 0
    %p113 = por %p111, %p112
    %p114 = scmp.ne.s32.totalorder %s103, %s106
    %p115 = scmp.eq.s32.totalorder %s14, 3
    %p116 = por %p114, %p115
    %p117 = scmp.ne.s32.totalorder %s106, %s107
    %p118 = scmp.eq.s32.totalorder %s14, 0
    %p119 = por %p117, %p118
    %p120 = scmp.ne.s32.totalorder %s106, %s107
    %p121 = scmp.eq.s32.totalorder %s15, 3
    %p122 = por %p120, %p121
    %p124 = scmp.ne.s32.totalorder %s107, %s123
    %p125 = scmp.eq.s32.totalorder %s15, 0
    %p126 = por %p124, %p125
    %p127 = scmp.le.s32.totalorder 1, %s9
    %p128 = scmp.lt.s32.totalorder %s9, 5
    %p129 = pnand %p127, %p128
    %p130 = pneg %p129
    // Predicated region
    $region9: #{conv_t_block_forward.3} parent=5 // pred_check
      _
    $region10: #{conv_t_block_forward.3} parent=5 // pred_check_branch
      %132 = sbr.rel (%p129) target = $region12
    $region11: #{conv_t_block_forward.3} parent=5 // pred_region
      %s133 = ssub.s32 %s9, 1
      // Predicated region
      $region13: #{conv_t_block_forward.3} parent=11 // pred_check
        %p134 = pneg %p70
      $region14: #{conv_t_block_forward.3} parent=11 // pred_check_branch
        %136 = sbr.rel (%p134) target = $region16
      $region15: #{conv_t_block_forward.3} parent=11 // pred_region
        _
      $region16: #{conv_t_block_forward.3} parent=11 // pred_fallthru
        _
      // Predicated region
      $region17: #{conv_t_block_forward.3} parent=11 // pred_check
        %p137 = pneg %p91
      $region18: #{conv_t_block_forward.3} parent=11 // pred_check_branch
        %139 = sbr.rel (%p137) target = $region20
      $region19: #{conv_t_block_forward.3} parent=11 // pred_region
        _
      $region20: #{conv_t_block_forward.3} parent=11 // pred_fallthru
        _
    $region12: #{conv_t_block_forward.3} parent=5 // pred_fallthru
      _
    %p140 = scmp.lt.s32.totalorder %s9, 4
    // Predicated region
    $region21: #{conv_t_block_forward.3} parent=5 // pred_check
      %p141 = pneg %p140
    $region22: #{conv_t_block_forward.3} parent=5 // pred_check_branch
      %143 = sbr.rel (%p141) target = $region24
    $region23: #{conv_t_block_forward.3} parent=5 // pred_region
      // Predicated region
      $region25: #{conv_t_block_forward.3} parent=23 // pred_check
        %p144 = pneg %p43
      $region26: #{conv_t_block_forward.3} parent=23 // pred_check_branch
        %146 = sbr.rel (%p144) target = $region28
      $region27: #{conv_t_block_forward.3} parent=23 // pred_region
        %s147 = smul.u32 4, %s17
        %p148 = scmp.lt.s32.totalorder %s16, 3
        %s149 = scalar_select %p148, %s16, 3
        %p150 = scmp.lt.s32.totalorder %s147, 3
        %s151 = scalar_select %p150, %s147, 3
        %s152 = smul.addr %s149, 4
        %s153 = sadd.s32 %s151, %s152
        %s154 = smul.addr %s153, 8
        %s155 = scalar_lea.vmem %s0, %s154
        %s156 = smul.u32 4, %s17
      $region28: #{conv_t_block_forward.3} parent=23 // pred_fallthru
        _
    $region24: #{conv_t_block_forward.3} parent=5 // pred_fallthru
      _
    %p157 = scmp.le.s32.totalorder 1, %s9
    %p158 = scmp.lt.s32.totalorder %s9, 5
    %p159 = pnand %p157, %p158
    %p160 = pneg %p159
    // Predicated region
    $region29: #{conv_t_block_forward.3} parent=5 // pred_check
      _
    $region30: #{conv_t_block_forward.3} parent=5 // pred_check_branch
      %162 = sbr.rel (%p159) target = $region32
    $region31: #{conv_t_block_forward.3} parent=5 // pred_region
      %s163 = ssub.s32 %s9, 1
      %s164 = smul.u32 4, %s19
      %p165 = scmp.lt.s32.totalorder %s18, 3
      %s166 = scalar_select %p165, %s18, 3
      %p167 = scmp.lt.s32.totalorder %s164, 3
      %s168 = scalar_select %p167, %s164, 3
      %s169 = smul.addr %s166, 4
      %s170 = sadd.s32 %s168, %s169
      %s171 = smul.addr %s170, 8
      %s172 = scalar_lea.vmem %s0, %s171
      %p173 = pneg %p49
      %p174 = pneg %p46
      %p175 = pneg %p70
      %p176 = pneg %p67
      %p177 = pneg %p91
      %p178 = pneg %p88
      %p179 = pneg %p119
      %p180 = pneg %p116
      %s181 = smul.u32 4, %s19
      %p182 = scmp.lt.s32.totalorder %s18, 3
      %s183 = scalar_select %p182, %s18, 3
      %p184 = scmp.lt.s32.totalorder %s181, 3
      %s185 = scalar_select %p184, %s181, 3
      %s186 = smul.addr %s183, 4
      %s187 = sadd.s32 %s185, %s186
      %s188 = smul.addr %s187, 8
      %s189 = scalar_lea.vmem %s3, %s188
      %s190 = smul.u32 4, %s19
      %p191 = scmp.lt.s32.totalorder %s18, 3
      %s192 = scalar_select %p191, %s18, 3
      %p193 = scmp.lt.s32.totalorder %s190, 3
      %s194 = scalar_select %p193, %s190, 3
      %s195 = smul.addr %s192, 4
      %s196 = sadd.s32 %s194, %s195
      %s197 = smul.addr %s196, 8
      %s198 = scalar_lea.vmem %s0, %s197
      %s199 = smul.u32 4, %s19
      %s200 = smul.u32 4, %s19
      %p201 = scmp.lt.s32.totalorder %s18, 3
      %s202 = scalar_select %p201, %s18, 3
      %p203 = scmp.lt.s32.totalorder %s200, 3
      %s204 = scalar_select %p203, %s200, 3
      %s205 = smul.addr %s202, 4
      %s206 = sadd.s32 %s204, %s205
      %s207 = smul.addr %s206, 8
      %s208 = scalar_lea.vmem %s3, %s207
      %s209 = smul.u32 4, %s19
      %v210 = vld [vmem:[%s198] sm:$0xff]
      %v211 = vld [vmem:[%s198 + $0x8] sm:$0xff]
      %v212 = vld [vmem:[%s198 + $0x10] sm:$0xff]
      %v213 = vld [vmem:[%s198 + $0x18] sm:$0xff]
      %v214 = vld [vmem:[%s1] sm:$0xff]
      %216 = vset.pattern.permute.xlu0 0
      %217 = vperm.xlu0 %216, %v214
      %v218 = vpop.permute.xlu0 %217
      %v220 = vmul.f32 %v210, %v218
      %v221 = vmul.f32 %v211, %v218
      %v222 = vmul.f32 %v212, %v218
      %v223 = vmul.f32 %v213, %v218
      %v224 = vld [vmem:[%s2] sm:$0xff]
      %226 = vset.pattern.permute.xlu0 0
      %227 = vperm.xlu0 %226, %v224
      %v228 = vpop.permute.xlu0 %227
      %v230 = vadd.f32 %v220, %v228
      %v231 = vadd.f32 %v221, %v228
      %v232 = vadd.f32 %v222, %v228
      %v233 = vadd.f32 %v223, %v228
      %vm234 = vcmp.ge.f32.partialorder %v230, 0.0
      %vm235 = vcmp.ge.f32.partialorder %v231, 0.0
      %vm236 = vcmp.ge.f32.partialorder %v232, 0.0
      %vm237 = vcmp.ge.f32.partialorder %v233, 0.0
      %v238 = vmul.f32 %v230, 0.03
      %v239 = vmul.f32 %v231, 0.03
      %v240 = vmul.f32 %v232, 0.03
      %v241 = vmul.f32 %v233, 0.03
      %v242 = vsel %vm234, %v230, %v238
      %v243 = vsel %vm235, %v231, %v239
      %v244 = vsel %vm236, %v232, %v240
      %v245 = vsel %vm237, %v233, %v241
      %246 = vst [vmem:[%s208] sm:$0xff] %v242
      %247 = vst [vmem:[%s208 + $0x8] sm:$0xff] %v243
      %248 = vst [vmem:[%s208 + $0x10] sm:$0xff] %v244
      %249 = vst [vmem:[%s208 + $0x18] sm:$0xff] %v245
      %s250 = smul.u32 4, %s19
      %p251 = scmp.lt.s32.totalorder %s18, 3
      %s252 = scalar_select %p251, %s18, 3
      %p253 = scmp.lt.s32.totalorder %s250, 3
      %s254 = scalar_select %p253, %s250, 3
      %s255 = smul.addr %s252, 4
      %s256 = sadd.s32 %s254, %s255
      %s257 = smul.addr %s256, 8
      %s258 = scalar_lea.vmem %s3, %s257
      // Predicated region
      $region33: #{conv_t_block_forward.3} parent=31 // pred_check
        %p259 = pneg %p116
      $region34: #{conv_t_block_forward.3} parent=31 // pred_check_branch
        %261 = sbr.rel (%p259) target = $region36
      $region35: #{conv_t_block_forward.3} parent=31 // pred_region
        %s262 = smul.u32 4, %s19
      $region36: #{conv_t_block_forward.3} parent=31 // pred_fallthru
        _
    $region32: #{conv_t_block_forward.3} parent=5 // pred_fallthru
      _
    %p263 = scmp.le.s32.totalorder 2, %s9
    // Predicated region
    $region37: #{conv_t_block_forward.3} parent=5 // pred_check
      %p264 = pneg %p263
    $region38: #{conv_t_block_forward.3} parent=5 // pred_check_branch
      %266 = sbr.rel (%p264) target = $region40
    $region39: #{conv_t_block_forward.3} parent=5 // pred_region
      %s267 = ssub.s32 %s9, 2
      // Predicated region
      $region41: #{conv_t_block_forward.3} parent=39 // pred_check
        %p268 = pneg %p122
      $region42: #{conv_t_block_forward.3} parent=39 // pred_check_branch
        %270 = sbr.rel (%p268) target = $region44
      $region43: #{conv_t_block_forward.3} parent=39 // pred_region
        %s271 = smul.u32 4, %s21
        %p272 = scmp.lt.s32.totalorder %s20, 3
        %s273 = scalar_select %p272, %s20, 3
        %p274 = scmp.lt.s32.totalorder %s271, 3
        %s275 = scalar_select %p274, %s271, 3
        %s276 = smul.addr %s273, 4
        %s277 = sadd.s32 %s275, %s276
        %s278 = smul.addr %s277, 8
        %s279 = scalar_lea.vmem %s3, %s278
      $region44: #{conv_t_block_forward.3} parent=39 // pred_fallthru
        _
    $region40: #{conv_t_block_forward.3} parent=5 // pred_fallthru
      _
  $region6: #{conv_t_block_forward.3} parent=0 // loop_footer
    %s13 = sadd.s32 1, %s9
  $region7: #{conv_t_block_forward.3} parent=0 // loop_footer_branch
    %8 = sbr.rel target = $region3
  $region8: #{conv_t_block_forward.3} parent=0 // loop_exit
    _

// kernel: conv_t_block_forward.2
$region0: #{conv_t_block_forward.2}
  #allocation0 [shape = 'u32[]', space=smem, size = 0x4, offset = 0x4, fixed_abs, tag = 'smem constant byte address 0x4 - core index']
  #allocation1 [shape = 'u32[144,128]{1,0:T(1,128)}', space=vmem, size = 0x12000, scoped, tag = 'internal scratch']
  %s0 = inlined_call_operand.vmem [shape: bf16[4,16,512], index: 0, kind: input, shape index: {}]
  %s1 = inlined_call_operand.vmem [shape: bf16[4,8,16], index: 1, kind: input, shape index: {}]
  %s2 = inlined_call_operand.vmem [shape: f32[8,1], index: 2, kind: input, shape index: {}]
  %s3 = inlined_call_operand.vmem [shape: f32[4,1,512], index: 3, kind: input, shape index: {}]
  %s4 = inlined_call_operand.vmem [shape: f32[4,8,512], index: 4, kind: output, shape index: {0}]
  %s5 = inlined_call_operand.vmem [shape: f32[4,1,8,1], index: 5, kind: output, shape index: {1}]
  %s6 = inlined_call_operand.vmem [shape: f32[4,1,8,1], index: 6, kind: output, shape index: {2}]
  %7 = xla_tuple %s4, %s5, %s6
  %s8 = sld [smem:[#allocation0]]
  $region65: #{conv_t_block_forward.2} parent=0
    _
  %s10 = ssub.s32 1, %s8
  %s11 = scalar_select 0, %s10, %s8
  loop: start=0, step=1, limit=6
  $region2: #{conv_t_block_forward.2} parent=0 // loop_pre_header
    _
  $region3: #{conv_t_block_forward.2} parent=0 // loop_header
    %s13 = sphi 0, %s17
    %p14 = scmp.ge.s32.totalorder %s13, 6
    %s20 = sphi 0, %s32
    %s21 = sphi 0, %s28
    %s22 = sphi 0, %s20
    %s23 = sphi 0, %s21
    %s24 = sphi 0, %s22
    %s25 = sphi 0, %s23
    %s37 = sphi 0, %s39
    %s40 = sphi 0, %s37
    %s41 = sphi 0, %s40
    %s57 = sphi 0, %s41
    %s63 = sphi 0, %s65
    %s66 = sphi 0, %s63
    %s67 = sphi 0, %s66
    %s83 = sphi 0, %s67
    %s87 = sphi 0, %s87
    %s89 = sphi 0, %s87
    %s90 = sphi 0, %s89
    %s104 = sphi 0, %s90
    %s112 = sphi 0, %s114
    %s115 = sphi 0, %s112
    %s116 = sphi 0, %s115
    %s132 = sphi 0, %s116
    %s140 = sphi 0, %s142
    %s143 = sphi 0, %s140
    %s144 = sphi 0, %s143
    %s160 = sphi 0, %s144
    %s168 = sphi 0, %s170
    %s171 = sphi 0, %s168
    %s172 = sphi 0, %s171
    %s188 = sphi 0, %s172
    %s196 = sphi 0, %s198
    %s199 = sphi 0, %s196
    %s200 = sphi 0, %s199
    %s216 = sphi 0, %s200
  $region4: #{conv_t_block_forward.2} parent=0 // loop_header_branch
    %16 = sbr.rel (%p14) target = $region8
  $region5: #{conv_t_block_forward.2} parent=0 // loop_body
    %s18 = ssub.s32 %s13, 1
    %s19 = ssub.s32 %s13, 2
    %s26 = sadd.s32 1, %s21
    %p27 = scmp.ge.s32.totalorder %s26, 1
    %s28 = scalar_select %p27, 0, %s26
    %s29 = sadd.s32 1, %s20
    %s30 = scalar_select %p27, %s29, %s20
    %p31 = scmp.ge.s32.totalorder %s30, 4
    %s32 = scalar_select %p31, 0, %s30
    %s33 = ssub.s32 %s20, %s32
    %s34 = ssub.s32 %s21, %s28
    %s35 = sor.u32 %s33, %s34
    %p36 = scmp.eq.s32.totalorder %s35, 0
    %s38 = sadd.s32 %s37, 1
    %s39 = scalar_select %p36, %s37, %s38
    %p42 = pneg %p36
    %p43 = scmp.eq.s32.totalorder %s13, 3
    %p44 = por %p42, %p43
    %p45 = scmp.ne.s32.totalorder %s37, %s40
    %p46 = scmp.eq.s32.totalorder %s13, 0
    %p47 = por %p45, %p46
    %p48 = scmp.ne.s32.totalorder %s37, %s40
    %p49 = scmp.eq.s32.totalorder %s18, 3
    %p50 = por %p48, %p49
    %p51 = scmp.ne.s32.totalorder %s40, %s41
    %p52 = scmp.eq.s32.totalorder %s18, 0
    %p53 = por %p51, %p52
    %p54 = scmp.ne.s32.totalorder %s40, %s41
    %p55 = scmp.eq.s32.totalorder %s19, 3
    %p56 = por %p54, %p55
    %p58 = scmp.ne.s32.totalorder %s41, %s57
    %p59 = scmp.eq.s32.totalorder %s19, 0
    %p60 = por %p58, %p59
    %s61 = ssub.s32 %s20, %s32
    %p62 = scmp.eq.s32.totalorder %s61, 0
    %s64 = sadd.s32 %s63, 1
    %s65 = scalar_select %p62, %s63, %s64
    %p68 = pneg %p62
    %p69 = scmp.eq.s32.totalorder %s13, 3
    %p70 = por %p68, %p69
    %p71 = scmp.ne.s32.totalorder %s63, %s66
    %p72 = scmp.eq.s32.totalorder %s13, 0
    %p73 = por %p71, %p72
    %p74 = scmp.ne.s32.totalorder %s63, %s66
    %p75 = scmp.eq.s32.totalorder %s18, 3
    %p76 = por %p74, %p75
    %p77 = scmp.ne.s32.totalorder %s66, %s67
    %p78 = scmp.eq.s32.totalorder %s18, 0
    %p79 = por %p77, %p78
    %p80 = scmp.ne.s32.totalorder %s66, %s67
    %p81 = scmp.eq.s32.totalorder %s19, 3
    %p82 = por %p80, %p81
    %p84 = scmp.ne.s32.totalorder %s67, %s83
    %p85 = scmp.eq.s32.totalorder %s19, 0
    %p86 = por %p84, %p85
    %s88 = sadd.s32 %s87, 1
    %p91 = scmp.eq.s32.totalorder %s13, 3
    %p92 = scmp.ne.s32.totalorder %s87, %s89
    %p93 = scmp.eq.s32.totalorder %s13, 0
    %p94 = por %p92, %p93
    %p95 = scmp.ne.s32.totalorder %s87, %s89
    %p96 = scmp.eq.s32.totalorder %s18, 3
    %p97 = por %p95, %p96
    %p98 = scmp.ne.s32.totalorder %s89, %s90
    %p99 = scmp.eq.s32.totalorder %s18, 0
    %p100 = por %p98, %p99
    %p101 = scmp.ne.s32.totalorder %s89, %s90
    %p102 = scmp.eq.s32.totalorder %s19, 3
    %p103 = por %p101, %p102
    %p105 = scmp.ne.s32.totalorder %s90, %s104
    %p106 = scmp.eq.s32.totalorder %s19, 0
    %p107 = por %p105, %p106
    %s108 = ssub.s32 %s20, %s32
    %s109 = ssub.s32 %s21, %s28
    %s110 = sor.u32 %s108, %s109
    %p111 = scmp.eq.s32.totalorder %s110, 0
    %s113 = sadd.s32 %s112, 1
    %s114 = scalar_select %p111, %s112, %s113
    %p117 = pneg %p111
    %p118 = scmp.eq.s32.totalorder %s13, 3
    %p119 = por %p117, %p118
    %p120 = scmp.ne.s32.totalorder %s112, %s115
    %p121 = scmp.eq.s32.totalorder %s13, 0
    %p122 = por %p120, %p121
    %p123 = scmp.ne.s32.totalorder %s112, %s115
    %p124 = scmp.eq.s32.totalorder %s18, 3
    %p125 = por %p123, %p124
    %p126 = scmp.ne.s32.totalorder %s115, %s116
    %p127 = scmp.eq.s32.totalorder %s18, 0
    %p128 = por %p126, %p127
    %p129 = scmp.ne.s32.totalorder %s115, %s116
    %p130 = scmp.eq.s32.totalorder %s19, 3
    %p131 = por %p129, %p130
    %p133 = scmp.ne.s32.totalorder %s116, %s132
    %p134 = scmp.eq.s32.totalorder %s19, 0
    %p135 = por %p133, %p134
    %s136 = ssub.s32 %s20, %s32
    %s137 = ssub.s32 %s21, %s28
    %s138 = sor.u32 %s136, %s137
    %p139 = scmp.eq.s32.totalorder %s138, 0
    %s141 = sadd.s32 %s140, 1
    %s142 = scalar_select %p139, %s140, %s141
    %p145 = pneg %p139
    %p146 = scmp.eq.s32.totalorder %s13, 3
    %p147 = por %p145, %p146
    %p148 = scmp.ne.s32.totalorder %s140, %s143
    %p149 = scmp.eq.s32.totalorder %s13, 0
    %p150 = por %p148, %p149
    %p151 = scmp.ne.s32.totalorder %s140, %s143
    %p152 = scmp.eq.s32.totalorder %s18, 3
    %p153 = por %p151, %p152
    %p154 = scmp.ne.s32.totalorder %s143, %s144
    %p155 = scmp.eq.s32.totalorder %s18, 0
    %p156 = por %p154, %p155
    %p157 = scmp.ne.s32.totalorder %s143, %s144
    %p158 = scmp.eq.s32.totalorder %s19, 3
    %p159 = por %p157, %p158
    %p161 = scmp.ne.s32.totalorder %s144, %s160
    %p162 = scmp.eq.s32.totalorder %s19, 0
    %p163 = por %p161, %p162
    %s164 = ssub.s32 %s20, %s32
    %s165 = ssub.s32 %s21, %s28
    %s166 = sor.u32 %s164, %s165
    %p167 = scmp.eq.s32.totalorder %s166, 0
    %s169 = sadd.s32 %s168, 1
    %s170 = scalar_select %p167, %s168, %s169
    %p173 = pneg %p167
    %p174 = scmp.eq.s32.totalorder %s13, 3
    %p175 = por %p173, %p174
    %p176 = scmp.ne.s32.totalorder %s168, %s171
    %p177 = scmp.eq.s32.totalorder %s13, 0
    %p178 = por %p176, %p177
    %p179 = scmp.ne.s32.totalorder %s168, %s171
    %p180 = scmp.eq.s32.totalorder %s18, 3
    %p181 = por %p179, %p180
    %p182 = scmp.ne.s32.totalorder %s171, %s172
    %p183 = scmp.eq.s32.totalorder %s18, 0
    %p184 = por %p182, %p183
    %p185 = scmp.ne.s32.totalorder %s171, %s172
    %p186 = scmp.eq.s32.totalorder %s19, 3
    %p187 = por %p185, %p186
    %p189 = scmp.ne.s32.totalorder %s172, %s188
    %p190 = scmp.eq.s32.totalorder %s19, 0
    %p191 = por %p189, %p190
    %s192 = ssub.s32 %s20, %s32
    %s193 = ssub.s32 %s21, %s28
    %s194 = sor.u32 %s192, %s193
    %p195 = scmp.eq.s32.totalorder %s194, 0
    %s197 = sadd.s32 %s196, 1
    %s198 = scalar_select %p195, %s196, %s197
    %p201 = pneg %p195
    %p202 = scmp.eq.s32.totalorder %s13, 3
    %p203 = por %p201, %p202
    %p204 = scmp.ne.s32.totalorder %s196, %s199
    %p205 = scmp.eq.s32.totalorder %s13, 0
    %p206 = por %p204, %p205
    %p207 = scmp.ne.s32.totalorder %s196, %s199
    %p208 = scmp.eq.s32.totalorder %s18, 3
    %p209 = por %p207, %p208
    %p210 = scmp.ne.s32.totalorder %s199, %s200
    %p211 = scmp.eq.s32.totalorder %s18, 0
    %p212 = por %p210, %p211
    %p213 = scmp.ne.s32.totalorder %s199, %s200
    %p214 = scmp.eq.s32.totalorder %s19, 3
    %p215 = por %p213, %p214
    %p217 = scmp.ne.s32.totalorder %s200, %s216
    %p218 = scmp.eq.s32.totalorder %s19, 0
    %p219 = por %p217, %p218
    %p220 = scmp.le.s32.totalorder 1, %s13
    %p221 = scmp.lt.s32.totalorder %s13, 5
    %p222 = pnand %p220, %p221
    %p223 = pneg %p222
    // Predicated region
    $region9: #{conv_t_block_forward.2} parent=5 // pred_check
      _
    $region10: #{conv_t_block_forward.2} parent=5 // pred_check_branch
      %225 = sbr.rel (%p222) target = $region12
    $region11: #{conv_t_block_forward.2} parent=5 // pred_region
      %s226 = ssub.s32 %s13, 1
      // Predicated region
      $region13: #{conv_t_block_forward.2} parent=11 // pred_check
        %p227 = pneg %p100
      $region14: #{conv_t_block_forward.2} parent=11 // pred_check_branch
        %229 = sbr.rel (%p227) target = $region16
      $region15: #{conv_t_block_forward.2} parent=11 // pred_region
        _
      $region16: #{conv_t_block_forward.2} parent=11 // pred_fallthru
        _
    $region12: #{conv_t_block_forward.2} parent=5 // pred_fallthru
      _
    %p230 = scmp.lt.s32.totalorder %s13, 4
    // Predicated region
    $region17: #{conv_t_block_forward.2} parent=5 // pred_check
      %p231 = pneg %p230
    $region18: #{conv_t_block_forward.2} parent=5 // pred_check_branch
      %233 = sbr.rel (%p231) target = $region20
    $region19: #{conv_t_block_forward.2} parent=5 // pred_region
      // Predicated region
      $region21: #{conv_t_block_forward.2} parent=19 // pred_check
        %p234 = pneg %p47
      $region22: #{conv_t_block_forward.2} parent=19 // pred_check_branch
        %236 = sbr.rel (%p234) target = $region24
      $region23: #{conv_t_block_forward.2} parent=19 // pred_region
        %s237 = smul.u32 4, %s21
        %p238 = scmp.lt.s32.totalorder %s20, 3
        %s239 = scalar_select %p238, %s20, 3
        %p240 = scmp.lt.s32.totalorder %s237, 3
        %s241 = scalar_select %p240, %s237, 3
        %s242 = smul.addr %s239, 8
        %s243 = sadd.s32 %s241, %s242
        %s244 = smul.addr %s243, 4
        %s245 = scalar_lea.vmem %s0, %s244
        %s246 = smul.u32 4, %s21
      $region24: #{conv_t_block_forward.2} parent=19 // pred_fallthru
        _
      // Predicated region
      $region25: #{conv_t_block_forward.2} parent=19 // pred_check
        %p247 = pneg %p73
      $region26: #{conv_t_block_forward.2} parent=19 // pred_check_branch
        %249 = sbr.rel (%p247) target = $region28
      $region27: #{conv_t_block_forward.2} parent=19 // pred_region
        %p250 = scmp.lt.s32.totalorder %s20, 3
        %s251 = scalar_select %p250, %s20, 3
        %s252 = smul.addr %s251, 4
        %s253 = scalar_lea.vmem %s1, %s252
      $region28: #{conv_t_block_forward.2} parent=19 // pred_fallthru
        _
      // Predicated region
      $region29: #{conv_t_block_forward.2} parent=19 // pred_check
        %p254 = pneg %p122
      $region30: #{conv_t_block_forward.2} parent=19 // pred_check_branch
        %256 = sbr.rel (%p254) target = $region32
      $region31: #{conv_t_block_forward.2} parent=19 // pred_region
        %s257 = smul.u32 4, %s21
        %p258 = scmp.lt.s32.totalorder %s20, 3
        %s259 = scalar_select %p258, %s20, 3
        %p260 = scmp.lt.s32.totalorder %s257, 3
        %s261 = scalar_select %p260, %s257, 3
        %s262 = smul.addr %s259, 4
        %s263 = sadd.s32 %s261, %s262
        %s264 = scalar_lea.vmem %s3, %s263
        %s265 = smul.u32 4, %s21
      $region32: #{conv_t_block_forward.2} parent=19 // pred_fallthru
        _
    $region20: #{conv_t_block_forward.2} parent=5 // pred_fallthru
      _
    %p266 = scmp.le.s32.totalorder 1, %s13
    %p267 = scmp.lt.s32.totalorder %s13, 5
    %p268 = pnand %p266, %p267
    %p269 = pneg %p268
    // Predicated region
    $region33: #{conv_t_block_forward.2} parent=5 // pred_check
      _
    $region34: #{conv_t_block_forward.2} parent=5 // pred_check_branch
      %271 = sbr.rel (%p268) target = $region36
    $region35: #{conv_t_block_forward.2} parent=5 // pred_region
      %s272 = ssub.s32 %s13, 1
      %s273 = smul.u32 4, %s23
      %p274 = scmp.lt.s32.totalorder %s22, 3
      %s275 = scalar_select %p274, %s22, 3
      %p276 = scmp.lt.s32.totalorder %s273, 3
      %s277 = scalar_select %p276, %s273, 3
      %s278 = smul.addr %s275, 8
      %s279 = sadd.s32 %s277, %s278
      %s280 = smul.addr %s279, 4
      %s281 = scalar_lea.vmem %s0, %s280
      %p282 = pneg %p53
      %p283 = pneg %p50
      %p284 = scmp.lt.s32.totalorder %s22, 3
      %s285 = scalar_select %p284, %s22, 3
      %s286 = smul.addr %s285, 4
      %s287 = scalar_lea.vmem %s1, %s286
      %p288 = pneg %p79
      %p289 = pneg %p76
      %p290 = pneg %p100
      %p291 = pneg %p97
      %s292 = smul.u32 4, %s23
      %p293 = scmp.lt.s32.totalorder %s22, 3
      %s294 = scalar_select %p293, %s22, 3
      %p295 = scmp.lt.s32.totalorder %s292, 3
      %s296 = scalar_select %p295, %s292, 3
      %s297 = smul.addr %s294, 4
      %s298 = sadd.s32 %s296, %s297
      %s299 = scalar_lea.vmem %s3, %s298
      %p300 = pneg %p128
      %p301 = pneg %p125
      %p302 = pneg %p156
      %p303 = pneg %p153
      %s304 = smul.u32 4, %s23
      %p305 = scmp.lt.s32.totalorder %s22, 3
      %s306 = scalar_select %p305, %s22, 3
      %p307 = scmp.lt.s32.totalorder %s304, 3
      %s308 = scalar_select %p307, %s304, 3
      %s309 = smul.addr %s306, 4
      %s310 = sadd.s32 %s308, %s309
      %s311 = smul.addr %s310, 8
      %s312 = scalar_lea.vmem %s4, %s311
      %p313 = pneg %p184
      %p314 = pneg %p181
      %p315 = scmp.lt.s32.totalorder %s22, 3
      %s316 = scalar_select %p315, %s22, 3
      %p317 = scmp.lt.s32.totalorder %s23, 0
      %s318 = scalar_select %p317, %s23, 0
      %s319 = sadd.s32 %s318, %s316
      %s320 = smul.addr %s319, 8
      %s321 = scalar_lea.vmem %s5, %s320
      %p322 = pneg %p212
      %p323 = pneg %p209
      %p324 = scmp.lt.s32.totalorder %s22, 3
      %s325 = scalar_select %p324, %s22, 3
      %p326 = scmp.lt.s32.totalorder %s23, 0
      %s327 = scalar_select %p326, %s23, 0
      %s328 = sadd.s32 %s327, %s325
      %s329 = smul.addr %s328, 8
      %s330 = scalar_lea.vmem %s6, %s329
      %s331 = smul.u32 4, %s23
      %p332 = scmp.lt.s32.totalorder %s22, 3
      %s333 = scalar_select %p332, %s22, 3
      %p334 = scmp.lt.s32.totalorder %s331, 3
      %s335 = scalar_select %p334, %s331, 3
      %s336 = smul.addr %s333, 8
      %s337 = sadd.s32 %s335, %s336
      %s338 = smul.addr %s337, 4
      %s339 = scalar_lea.vmem %s0, %s338
      %s340 = smul.u32 4, %s23
      %p341 = scmp.lt.s32.totalorder %s22, 3
      %s342 = scalar_select %p341, %s22, 3
      %s343 = smul.addr %s342, 4
      %s344 = scalar_lea.vmem %s1, %s343
      %s345 = smul.u32 4, %s23
      %p346 = scmp.lt.s32.totalorder %s22, 3
      %s347 = scalar_select %p346, %s22, 3
      %p348 = scmp.lt.s32.totalorder %s345, 3
      %s349 = scalar_select %p348, %s345, 3
      %s350 = smul.addr %s347, 4
      %s351 = sadd.s32 %s349, %s350
      %s352 = scalar_lea.vmem %s3, %s351
      %s353 = smul.u32 4, %s23
      %s354 = smul.u32 4, %s23
      %p355 = scmp.lt.s32.totalorder %s22, 3
      %s356 = scalar_select %p355, %s22, 3
      %p357 = scmp.lt.s32.totalorder %s354, 3
      %s358 = scalar_select %p357, %s354, 3
      %s359 = smul.addr %s356, 4
      %s360 = sadd.s32 %s358, %s359
      %s361 = smul.addr %s360, 8
      %s362 = scalar_lea.vmem %s4, %s361
      %s363 = smul.u32 4, %s23
      %p364 = scmp.lt.s32.totalorder %s22, 3
      %s365 = scalar_select %p364, %s22, 3
      %p366 = scmp.lt.s32.totalorder %s23, 0
      %s367 = scalar_select %p366, %s23, 0
      %s368 = sadd.s32 %s367, %s365
      %s369 = smul.addr %s368, 8
      %s370 = scalar_lea.vmem %s5, %s369
      %p371 = scmp.lt.s32.totalorder %s22, 3
      %s372 = scalar_select %p371, %s22, 3
      %p373 = scmp.lt.s32.totalorder %s23, 0
      %s374 = scalar_select %p373, %s23, 0
      %s375 = sadd.s32 %s374, %s372
      %s376 = smul.addr %s375, 8
      %s377 = scalar_lea.vmem %s6, %s376
      %v379 = vld [vmem:[%s344] sm:$0xf]
      %v380 = vld [vmem:[%s339] sm:$0xff]
      %v381 = vld [vmem:[%s339 + $0x8] sm:$0xff]
      %v382 = vld [vmem:[%s339 + $0x10] sm:$0xff]
      %v383 = vld [vmem:[%s339 + $0x18] sm:$0xff]
      %v384 = vld [vmem:[%s2] sm:$0xff]
      %386 = vset.pattern.permute.xlu0 0
      %387 = vperm.xlu0 %386, %v384
      %v388 = vpop.permute.xlu0 %387
      %v394 = vunpack.c.l.b16 %v380
      %v395 = vunpack.c.h.b16 %v380
      %v396 = vunpack.c.l.b16 %v381
      %v397 = vunpack.c.h.b16 %v381
      %v398 = vunpack.c.l.b16 %v382
      %v399 = vunpack.c.h.b16 %v382
      %v400 = vunpack.c.l.b16 %v383
      %v401 = vunpack.c.h.b16 %v383
      %v402 = vpack.c.b16 %v398, %v394
      %v403 = vpack.c.b16 %v399, %v395
      %v404 = vpack.c.b16 %v400, %v396
      %v405 = vpack.c.b16 %v401, %v397
      %vm410 = vcmask 130048
      %v412 = vsel %vm410, %v379, 0
      %414 = vmatprep.subr.bf16.mxu0 %v403
      %415 = vmatpush1.bf16.msra.mxu0 %v402
      %416 = vmatprep.subr.bf16.mxu0 0
      %417 = vmatpush1.bf16.msra.mxu0 0
      %418 = vmatprep.subr.bf16.mxu0 0
      %419 = vmatpush1.bf16.msra.mxu0 0
      %420 = vmatprep.subr.bf16.mxu0 0
      %421 = vmatpush1.bf16.msra.mxu0 0
      %422 = vmatprep.subr.bf16.mxu0 0
      %423 = vmatpush1.bf16.msra.mxu0 0
      %424 = vmatprep.subr.bf16.mxu0 0
      %425 = vmatpush1.bf16.msra.mxu0 0
      %426 = vmatprep.subr.bf16.mxu0 0
      %427 = vmatpush1.bf16.msra.mxu0 0
      %428 = vmatprep.subr.bf16.mxu0 0
      %429 = vmatpush1.bf16.msra.mxu0 0
      %430 = vmatprep.subr.bf16.mxu0 0
      %431 = vmatpush1.bf16.msra.mxu0 0
      %432 = vmatprep.subr.bf16.mxu0 0
      %433 = vmatpush1.bf16.msra.mxu0 0
      %434 = vmatprep.subr.bf16.mxu0 0
      %435 = vmatpush1.bf16.msra.mxu0 0
      %436 = vmatprep.subr.bf16.mxu0 0
      %437 = vmatpush1.bf16.msra.mxu0 0
      %438 = vmatprep.subr.bf16.mxu0 0
      %439 = vmatpush1.bf16.msra.mxu0 0
      %440 = vmatprep.subr.bf16.mxu0 0
      %441 = vmatpush1.bf16.msra.mxu0 0
      %442 = vmatprep.subr.bf16.mxu0 0
      %443 = vmatpush1.bf16.msra.mxu0 0
      %444 = vmatprep.subr.bf16.mxu0 0
      %445 = vmatpush1.bf16.msra.mxu0 0
      %446 = vmatprep.mubr.bf16.mxu0 0
      %447 = vmatmul.mubr.bf16.gmra.mrb[0].mxu0 %v412
      %v448 = vpop.f32.mrb[0].mxu0
      %v449 = vadd.f32 %v388, %v448
      %v450 = vpop.f32.mrb[0].mxu0
      %v451 = vadd.f32 %v388, %v450
      %v452 = vpop.f32.mrb[0].mxu0
      %v453 = vpop.f32.mrb[0].mxu0
      %454 = vdwg.mxu0
      %455 = vmatprep.subr.bf16.mxu0 %v405
      %456 = vmatpush1.bf16.msra.mxu0 %v404
      %457 = vmatprep.subr.bf16.mxu0 0
      %458 = vmatpush1.bf16.msra.mxu0 0
      %459 = vmatprep.subr.bf16.mxu0 0
      %460 = vmatpush1.bf16.msra.mxu0 0
      %461 = vmatprep.subr.bf16.mxu0 0
      %462 = vmatpush1.bf16.msra.mxu0 0
      %463 = vmatprep.subr.bf16.mxu0 0
      %464 = vmatpush1.bf16.msra.mxu0 0
      %465 = vmatprep.subr.bf16.mxu0 0
      %466 = vmatpush1.bf16.msra.mxu0 0
      %467 = vmatprep.subr.bf16.mxu0 0
      %468 = vmatpush1.bf16.msra.mxu0 0
      %469 = vmatprep.subr.bf16.mxu0 0
      %470 = vmatpush1.bf16.msra.mxu0 0
      %471 = vmatprep.subr.bf16.mxu0 0
      %472 = vmatpush1.bf16.msra.mxu0 0
      %473 = vmatprep.subr.bf16.mxu0 0
      %474 = vmatpush1.bf16.msra.mxu0 0
      %475 = vmatprep.subr.bf16.mxu0 0
      %476 = vmatpush1.bf16.msra.mxu0 0
      %477 = vmatprep.subr.bf16.mxu0 0
      %478 = vmatpush1.bf16.msra.mxu0 0
      %479 = vmatprep.subr.bf16.mxu0 0
      %480 = vmatpush1.bf16.msra.mxu0 0
      %481 = vmatprep.subr.bf16.mxu0 0
      %482 = vmatpush1.bf16.msra.mxu0 0
      %483 = vmatprep.subr.bf16.mxu0 0
      %484 = vmatpush1.bf16.msra.mxu0 0
      %485 = vmatprep.subr.bf16.mxu0 0
      %486 = vmatpush1.bf16.msra.mxu0 0
      %487 = vmatprep.mubr.bf16.mxu0 0
      %488 = vmatmul.mubr.bf16.gmra.mrb[0].mxu0 %v412
      %v489 = vpop.f32.mrb[0].mxu0
      %v490 = vadd.f32 %v388, %v489
      %v491 = vpop.f32.mrb[0].mxu0
      %v492 = vadd.f32 %v388, %v491
      %v493 = vpop.f32.mrb[0].mxu0
      %v494 = vpop.f32.mrb[0].mxu0
      %495 = vdwg.mxu0
      %496 = vst [vmem:[%s362] sm:$0xff] %v449
      %497 = vst [vmem:[%s362 + $0x8] sm:$0xff] %v451
      %498 = vst [vmem:[%s362 + $0x10] sm:$0xff] %v490
      %499 = vst [vmem:[%s362 + $0x18] sm:$0xff] %v492
      %v500 = vld [vmem:[%s352] sm:$0xf]
      %v502 = vlaneseq
      %v503 = vshrl.u32 %v502, 7
      %v504 = vsub.s32 0, %v503
      %v505 = vrot.slane %v500, %v504
      %v506 = vlaneseq
      %v507 = vshrl.u32 %v506, 7
      %v508 = vsub.s32 1, %v507
      %v509 = vrot.slane %v500, %v508
      %v510 = vlaneseq
      %v511 = vshrl.u32 %v510, 7
      %v512 = vsub.s32 2, %v511
      %v513 = vrot.slane %v500, %v512
      %v514 = vlaneseq
      %v515 = vshrl.u32 %v514, 7
      %v516 = vsub.s32 3, %v515
      %v517 = vrot.slane %v500, %v516
      %v522 = vmul.f32 %v449, %v505
      %v523 = vmul.f32 %v451, %v509
      %v524 = vmul.f32 %v490, %v513
      %v525 = vmul.f32 %v492, %v517
      %v526 = vadd.f32 %v522, %v523
      %v527 = vadd.f32 %v526, %v524
      %v528 = vadd.f32 %v527, %v525
      %529 = vadd.xlane.f32.xlu0 %v528
      %v530 = vpop.xlane.xlu0 %529
      %vm531 = vcmask 7168
      %532 = vst.msk [vmem:[%s370] sm:$0xff] %vm531, %v530
      %v533 = vmul.f32 %v522, %v449
      %v534 = vmul.f32 %v523, %v451
      %v535 = vmul.f32 %v524, %v490
      %v536 = vmul.f32 %v525, %v492
      %v537 = vadd.f32 %v533, %v534
      %v538 = vadd.f32 %v537, %v535
      %v539 = vadd.f32 %v538, %v536
      %540 = vadd.xlane.f32.xlu0 %v539
      %v541 = vpop.xlane.xlu0 %540
      %542 = vst.msk [vmem:[%s377] sm:$0xff] %vm531, %v541
      %s543 = smul.u32 4, %s23
      %p544 = scmp.lt.s32.totalorder %s22, 3
      %s545 = scalar_select %p544, %s22, 3
      %p546 = scmp.lt.s32.totalorder %s543, 3
      %s547 = scalar_select %p546, %s543, 3
      %s548 = smul.addr %s545, 4
      %s549 = sadd.s32 %s547, %s548
      %s550 = smul.addr %s549, 8
      %s551 = scalar_lea.vmem %s4, %s550
      %p552 = scmp.lt.s32.totalorder %s22, 3
      %s553 = scalar_select %p552, %s22, 3
      %p554 = scmp.lt.s32.totalorder %s23, 0
      %s555 = scalar_select %p554, %s23, 0
      %s556 = sadd.s32 %s555, %s553
      %s557 = smul.addr %s556, 8
      %s558 = scalar_lea.vmem %s5, %s557
      %p559 = scmp.lt.s32.totalorder %s22, 3
      %s560 = scalar_select %p559, %s22, 3
      %p561 = scmp.lt.s32.totalorder %s23, 0
      %s562 = scalar_select %p561, %s23, 0
      %s563 = sadd.s32 %s562, %s560
      %s564 = smul.addr %s563, 8
      %s565 = scalar_lea.vmem %s6, %s564
      // Predicated region
      $region37: #{conv_t_block_forward.2} parent=35 // pred_check
        %p566 = pneg %p153
      $region38: #{conv_t_block_forward.2} parent=35 // pred_check_branch
        %568 = sbr.rel (%p566) target = $region40
      $region39: #{conv_t_block_forward.2} parent=35 // pred_region
        %s569 = smul.u32 4, %s23
      $region40: #{conv_t_block_forward.2} parent=35 // pred_fallthru
        _
      // Predicated region
      $region41: #{conv_t_block_forward.2} parent=35 // pred_check
        %p570 = pneg %p181
      $region42: #{conv_t_block_forward.2} parent=35 // pred_check_branch
        %572 = sbr.rel (%p570) target = $region44
      $region43: #{conv_t_block_forward.2} parent=35 // pred_region
        _
      $region44: #{conv_t_block_forward.2} parent=35 // pred_fallthru
        _
      // Predicated region
      $region45: #{conv_t_block_forward.2} parent=35 // pred_check
        %p573 = pneg %p209
      $region46: #{conv_t_block_forward.2} parent=35 // pred_check_branch
        %575 = sbr.rel (%p573) target = $region48
      $region47: #{conv_t_block_forward.2} parent=35 // pred_region
        _
      $region48: #{conv_t_block_forward.2} parent=35 // pred_fallthru
        _
    $region36: #{conv_t_block_forward.2} parent=5 // pred_fallthru
      _
    %p576 = scmp.le.s32.totalorder 2, %s13
    // Predicated region
    $region49: #{conv_t_block_forward.2} parent=5 // pred_check
      %p577 = pneg %p576
    $region50: #{conv_t_block_forward.2} parent=5 // pred_check_branch
      %579 = sbr.rel (%p577) target = $region52
    $region51: #{conv_t_block_forward.2} parent=5 // pred_region
      %s580 = ssub.s32 %s13, 2
      // Predicated region
      $region53: #{conv_t_block_forward.2} parent=51 // pred_check
        %p581 = pneg %p159
      $region54: #{conv_t_block_forward.2} parent=51 // pred_check_branch
        %583 = sbr.rel (%p581) target = $region56
      $region55: #{conv_t_block_forward.2} parent=51 // pred_region
        %s584 = smul.u32 4, %s25
        %p585 = scmp.lt.s32.totalorder %s24, 3
        %s586 = scalar_select %p585, %s24, 3
        %p587 = scmp.lt.s32.totalorder %s584, 3
        %s588 = scalar_select %p587, %s584, 3
        %s589 = smul.addr %s586, 4
        %s590 = sadd.s32 %s588, %s589
        %s591 = smul.addr %s590, 8
        %s592 = scalar_lea.vmem %s4, %s591
      $region56: #{conv_t_block_forward.2} parent=51 // pred_fallthru
        _
      // Predicated region
      $region57: #{conv_t_block_forward.2} parent=51 // pred_check
        %p593 = pneg %p187
      $region58: #{conv_t_block_forward.2} parent=51 // pred_check_branch
        %595 = sbr.rel (%p593) target = $region60
      $region59: #{conv_t_block_forward.2} parent=51 // pred_region
        %p596 = scmp.lt.s32.totalorder %s24, 3
        %s597 = scalar_select %p596, %s24, 3
        %p598 = scmp.lt.s32.totalorder %s25, 0
        %s599 = scalar_select %p598, %s25, 0
        %s600 = sadd.s32 %s599, %s597
        %s601 = smul.addr %s600, 8
        %s602 = scalar_lea.vmem %s5, %s601
      $region60: #{conv_t_block_forward.2} parent=51 // pred_fallthru
        _
      // Predicated region
      $region61: #{conv_t_block_forward.2} parent=51 // pred_check
        %p603 = pneg %p215
      $region62: #{conv_t_block_forward.2} parent=51 // pred_check_branch
        %605 = sbr.rel (%p603) target = $region64
      $region63: #{conv_t_block_forward.2} parent=51 // pred_region
        %p606 = scmp.lt.s32.totalorder %s24, 3
        %s607 = scalar_select %p606, %s24, 3
        %p608 = scmp.lt.s32.totalorder %s25, 0
        %s609 = scalar_select %p608, %s25, 0
        %s610 = sadd.s32 %s609, %s607
        %s611 = smul.addr %s610, 8
        %s612 = scalar_lea.vmem %s6, %s611
      $region64: #{conv_t_block_forward.2} parent=51 // pred_fallthru
        _
    $region52: #{conv_t_block_forward.2} parent=5 // pred_fallthru
      _
  $region6: #{conv_t_block_forward.2} parent=0 // loop_footer
    %s17 = sadd.s32 1, %s13
  $region7: #{conv_t_block_forward.2} parent=0 // loop_footer_branch
    %12 = sbr.rel target = $region3
  $region8: #{conv_t_block_forward.2} parent=0 // loop_exit
    _

</llo_original>
